<compile_context>
chip_gen: v7x
topology: tpu7x:2x2x1
jax: 0.10.0
libtpu: 0.0.40
codegen_flags: <defaults>
</compile_context>

<pallas_src>
import functools

import jax
import jax.numpy as jnp
from jax.experimental import pallas as pl
from jax.experimental.pallas import tpu as pltpu


def _pixelwise_norm_kernel(x_ref, o_ref, *, alpha, inv_c):
    # Block is (1, C, T) or (1, C, Ts, 128); the channel axis is always axis=1.
    xs = x_ref[...]
    # Squared-mean over channels, accumulated in f32.  The upcast happens
    # inside the reduction expression (per-vreg) -- no full-tile f32 copy is
    # kept live across both uses of the input.
    ms = jnp.sum(xs.astype(jnp.float32) * xs.astype(jnp.float32),
                 axis=1, keepdims=True) * inv_c
    inv = jax.lax.rsqrt(ms + alpha)                 # EUP rsqrt on the small slab
    o_ref[...] = (xs.astype(jnp.float32) * inv).astype(o_ref.dtype)


def _tpu_budgets():
    """(per-tile-array budget bytes, scoped vmem limit bytes), generation-aware."""
    kind = ""
    try:
        kind = jax.devices()[0].device_kind.lower()
    except Exception:
        pass
    if "v7" in kind:
        # v7x: 64 MiB physical VMEM per TC.  Keep the pipelined footprint
        # (2 arrays x 2 buffers x tile ~= 4x tile) around 16 MiB.
        return 4 * 1024 * 1024, 32 * 1024 * 1024
    # v5e / v6e: 128 MiB physical VMEM -> larger tiles, raised scoped limit.
    return 8 * 1024 * 1024, 64 * 1024 * 1024


def _largest_divisor_tile(total, quantum, max_tile):
    """Largest multiple of `quantum` that divides `total` and is <= max_tile.

    `total` must be a positive multiple of `quantum`; result is >= quantum.
    """
    t = min(total, max(quantum, (max_tile // quantum) * quantum))
    while t > quantum and total % t != 0:
        t -= quantum
    return t


def pixelwise_norm(x, alpha=1e-8):
    """x: (N, C, H, W) -> y: (N, C, H, W) pixel-normalized over channels."""
    N, C, H, W = x.shape
    HW = H * W
    itemsize = jnp.dtype(x.dtype).itemsize
    tile_budget, vmem_limit = _tpu_budgets()

    # Pad the spatial axis up to a multiple of 128 (lane-dense stores; padded
    # pixels are zeros -> finite rsqrt(alpha) -> zero output, sliced off below).
    HW_pad = pl.cdiv(HW, 128) * 128
    x3 = x.reshape(N, C, HW)
    if HW_pad != HW:
        x3 = jnp.pad(x3, ((0, 0), (0, 0), (0, HW_pad - HW)))

    kernel = functools.partial(
        _pixelwise_norm_kernel, alpha=float(alpha), inv_c=1.0 / C)
    cost = pl.CostEstimate(flops=3 * N * C * HW,
                           transcendentals=N * HW,
                           bytes_accessed=2 * N * C * HW * itemsize)
    cparams = pltpu.CompilerParams(
        dimension_semantics=("parallel", "parallel"),
        vmem_limit_bytes=vmem_limit)

    rows = HW_pad // 128
    row_bytes = C * 128 * itemsize
    use_4d = C < 8 and (rows * row_bytes <= tile_budget
                        or (rows % 8 == 0 and tile_budget // row_bytes >= 8))

    if use_4d:
        # Small-C path: (N, C, rows, 128) layout, full vreg occupancy.
        x4 = x3.reshape(N, C, rows, 128)
        max_rows = max(1, tile_budget // row_bytes)
        ts = rows if max_rows >= rows else _largest_divisor_tile(rows, 8, max_rows)
        # Ensure >= 2 grid steps so both v7x TensorCores get work.
        if N * (rows // ts) < 2 and rows >= 16 and rows % 8 == 0:
            ts = _largest_divisor_tile(rows, 8, rows // 2)
        grid = (N, rows // ts)
        out = pl.pallas_call(
            kernel,
            out_shape=jax.ShapeDtypeStruct((N, C, rows, 128), x.dtype),
            grid=grid,
            in_specs=[pl.BlockSpec((1, C, ts, 128), lambda n, s: (n, 0, s, 0))],
            out_specs=pl.BlockSpec((1, C, ts, 128), lambda n, s: (n, 0, s, 0)),
            compiler_params=cparams,
            cost_estimate=cost,
        )(x4)
        out = out.reshape(N, C, HW_pad)
    else:
        # General path: (N, C, HW_pad) with a lane-axis spatial tile.
        max_t = max(128, tile_budget // (C * itemsize))
        tile_hw = _largest_divisor_tile(HW_pad, 128, max_t)
        if N * (HW_pad // tile_hw) < 2 and HW_pad >= 256:
            tile_hw = _largest_divisor_tile(HW_pad, 128, HW_pad // 2)
        grid = (N, HW_pad // tile_hw)
        out = pl.pallas_call(
            kernel,
            out_shape=jax.ShapeDtypeStruct((N, C, HW_pad), x.dtype),
            grid=grid,
            in_specs=[pl.BlockSpec((1, C, tile_hw), lambda n, s: (n, 0, s))],
            out_specs=pl.BlockSpec((1, C, tile_hw), lambda n, s: (n, 0, s)),
            compiler_params=cparams,
            cost_estimate=cost,
        )(x3)

    if HW_pad != HW:
        out = out[:, :, :HW]
    return out.reshape(N, C, H, W)


if __name__ == "__main__":
    # Small shapes consistent with the module: batch=2, channels=4, 16x16.
    N, C, H, W = 2, 4, 16, 16
    ALPHA = 1e-8

    key = jax.random.PRNGKey(0)
    x = jax.random.normal(key, (N, C, H, W), dtype=jnp.float32)

    y = pixelwise_norm(x, alpha=ALPHA)
    jax.block_until_ready(y)

    # Pure-JAX reference of the PyTorch forward pass.
    y_ref = x / jnp.sqrt(jnp.mean(x * x, axis=1, keepdims=True) + ALPHA)

    assert y.shape == x.shape
    assert jnp.allclose(y, y_ref, atol=1e-5, rtol=1e-5)

    print("KERNEL_OK")
</pallas_src>

<mosaic_0001>
module attributes {stable_mosaic.version = 11 : i64} {
  func.func @_pixelwise_norm_kernel(%arg0: i32, %arg1: i32, %arg2: memref<1x4x2x128xf32, #tpu.memory_space<vmem>>, %arg3: memref<1x4x2x128xf32, #tpu.memory_space<vmem>>) attributes {dimension_semantics = [#tpu.dimension_semantics<parallel>, #tpu.dimension_semantics<parallel>], iteration_bounds = array<i64: 2, 1>, scalar_prefetch = 0 : i64, scratch_operands = 0 : i64, tpu.core_type = #tpu.core_type<tc>, window_params = [{transform_indices = @transform_0, window_bounds = array<i64: 1, 4, 2, 128>}, {transform_indices = @transform_1, window_bounds = array<i64: 1, 4, 2, 128>}]} {
    %c0 = arith.constant 0 : index
    %c0_0 = arith.constant 0 : index
    %c0_1 = arith.constant 0 : index
    %c0_2 = arith.constant 0 : index
    %0 = vector.load %arg2[%c0, %c0_0, %c0_1, %c0_2] : memref<1x4x2x128xf32, #tpu.memory_space<vmem>>, vector<1x4x2x128xf32>
    %1 = arith.mulf %0, %0 : vector<1x4x2x128xf32>
    %cst = arith.constant dense<0.000000e+00> : vector<1x2x128xf32>
    %2 = vector.multi_reduction <add>, %1, %cst [1] : vector<1x4x2x128xf32> to vector<1x2x128xf32>
    %3 = vector.shape_cast %2 : vector<1x2x128xf32> to vector<1x1x2x128xf32>
    %cst_3 = arith.constant 2.500000e-01 : f32
    %4 = vector.broadcast %cst_3 : f32 to vector<1x1x2x128xf32>
    %5 = arith.mulf %3, %4 : vector<1x1x2x128xf32>
    %cst_4 = arith.constant 9.99999993E-9 : f32
    %6 = vector.broadcast %cst_4 : f32 to vector<1x1x2x128xf32>
    %7 = arith.addf %5, %6 : vector<1x1x2x128xf32>
    %8 = math.rsqrt %7 : vector<1x1x2x128xf32>
    %9 = vector.broadcast %8 : vector<1x1x2x128xf32> to vector<1x4x2x128xf32>
    %10 = arith.mulf %0, %9 : vector<1x4x2x128xf32>
    %c0_5 = arith.constant 0 : index
    %c0_6 = arith.constant 0 : index
    %c0_7 = arith.constant 0 : index
    %c0_8 = arith.constant 0 : index
    %11 = vector.load %arg3[%c0_5, %c0_6, %c0_7, %c0_8] : memref<1x4x2x128xf32, #tpu.memory_space<vmem>>, vector<1x4x2x128xf32>
    tpu.vector_store %arg3[%c0_5, %c0_6, %c0_7, %c0_8], %10 {strides = array<i32>} : memref<1x4x2x128xf32, #tpu.memory_space<vmem>>, vector<1x4x2x128xf32>,
    return
  }
  func.func @transform_0(%arg0: i32, %arg1: i32) -> (i32, i32, i32, i32) {
    %c0_i32 = arith.constant 0 : i32
    %c0_i32_0 = arith.constant 0 : i32
    %c0_i32_1 = arith.constant 0 : i32
    return %arg0, %c0_i32, %arg1, %c0_i32_0 : i32, i32, i32, i32
  }
  func.func @transform_1(%arg0: i32, %arg1: i32) -> (i32, i32, i32, i32) {
    %c0_i32 = arith.constant 0 : i32
    %c0_i32_0 = arith.constant 0 : i32
    %c0_i32_1 = arith.constant 0 : i32
    return %arg0, %c0_i32, %arg1, %c0_i32_0 : i32, i32, i32, i32
  }
}

</mosaic_0001>

<llo_original>
// kernel: tpu_custom_call.1
$region0: #{tpu_custom_call.1}
  #allocation0 [shape = 'u32[]', space=smem, size = 0x4, offset = 0x4, fixed_abs, tag = 'smem constant byte address 0x4 - core index']
  #allocation1 [shape = 'u32[144,128]{1,0:T(1,128)}', space=vmem, size = 0x12000, scoped, tag = 'internal scratch']
  %s0 = inlined_call_operand.hbm [shape: f32[2,4,2,128], index: 0, kind: input, shape index: {}]
  %s1 = inlined_call_operand.hbm [shape: f32[2,4,2,128], index: 1, kind: output, shape index: {}]
  %s2 = sld [smem:[#allocation0]]
  $region41: #{tpu_custom_call.1} parent=0
    _
  %s4 = ssub.s32 1, %s2
  %s5 = scalar_select 0, %s4, %s2
  $region1: #{tpu_custom_call.1} parent=0
    #allocation2 [shape = 'u8[8192]{0}', space=vmem, size = 0x2000, scoped, tag = 'input window, operand 0']
    #allocation3 [shape = 's32[2]{0}', space=sflag, size = 0x8, scoped, tag = 'scoped memory for tpu_custom_call.1']
    #allocation4 [shape = 's32[2]{0}', space=sflag, size = 0x8, scoped, tag = 'scoped memory for tpu_custom_call.1']
    #allocation5 [shape = 'u8[8192]{0}', space=vmem, size = 0x2000, scoped, tag = 'output window, operand 0']
    %6 = vsyncpa [#allocation3], 0
    %s7 = scalar_lea.sflag [#allocation3], 1
    %8 = vsyncpa %s7, 0
    %9 = vsyncpa [#allocation4], 0
    %s10 = scalar_lea.sflag [#allocation4], 1
    %11 = vsyncpa %s10, 0
    loop: start=0, step=1, limit=4
    $region2: #{tpu_custom_call.1} parent=1 // loop_pre_header
      _
    $region3: #{tpu_custom_call.1} parent=1 // loop_header
      %s13 = sphi 0, %s17
      %p14 = scmp.ge.s32.totalorder %s13, 4
      %s20 = sphi 0, %s32
      %s21 = sphi 0, %s28
      %s22 = sphi 0, %s20
      %s23 = sphi 0, %s21
      %s24 = sphi 0, %s22
      %s25 = sphi 0, %s23
      %s37 = sphi 0, %s39
      %s40 = sphi 0, %s37
      %s41 = sphi 0, %s40
      %s57 = sphi 0, %s41
      %s65 = sphi 0, %s67
      %s68 = sphi 0, %s65
      %s69 = sphi 0, %s68
      %s85 = sphi 0, %s69
    $region4: #{tpu_custom_call.1} parent=1 // loop_header_branch
      %16 = sbr.rel (%p14) target = $region8
    $region5: #{tpu_custom_call.1} parent=1 // loop_body
      %s18 = ssub.s32 %s13, 1
      %s19 = ssub.s32 %s13, 2
      %s26 = sadd.s32 1, %s21
      %p27 = scmp.ge.s32.totalorder %s26, 1
      %s28 = scalar_select %p27, 0, %s26
      %s29 = sadd.s32 1, %s20
      %s30 = scalar_select %p27, %s29, %s20
      %p31 = scmp.ge.s32.totalorder %s30, 2
      %s32 = scalar_select %p31, 0, %s30
      %s33 = ssub.s32 %s20, %s32
      %s34 = ssub.s32 %s21, %s28
      %s35 = sor.u32 %s33, %s34
      %p36 = scmp.eq.s32.totalorder %s35, 0
      %s38 = sadd.s32 %s37, 1
      %s39 = scalar_select %p36, %s37, %s38
      %p42 = pneg %p36
      %p43 = scmp.eq.s32.totalorder %s13, 1
      %p44 = por %p42, %p43
      %p45 = scmp.ne.s32.totalorder %s37, %s40
      %p46 = scmp.eq.s32.totalorder %s13, 0
      %p47 = por %p45, %p46
      %p48 = scmp.ne.s32.totalorder %s37, %s40
      %p49 = scmp.eq.s32.totalorder %s18, 1
      %p50 = por %p48, %p49
      %p51 = scmp.ne.s32.totalorder %s40, %s41
      %p52 = scmp.eq.s32.totalorder %s18, 0
      %p53 = por %p51, %p52
      %p54 = scmp.ne.s32.totalorder %s40, %s41
      %p55 = scmp.eq.s32.totalorder %s19, 1
      %p56 = por %p54, %p55
      %p58 = scmp.ne.s32.totalorder %s41, %s57
      %p59 = scmp.eq.s32.totalorder %s19, 0
      %p60 = por %p58, %p59
      %s61 = ssub.s32 %s20, %s32
      %s62 = ssub.s32 %s21, %s28
      %s63 = sor.u32 %s61, %s62
      %p64 = scmp.eq.s32.totalorder %s63, 0
      %s66 = sadd.s32 %s65, 1
      %s67 = scalar_select %p64, %s65, %s66
      %p70 = pneg %p64
      %p71 = scmp.eq.s32.totalorder %s13, 1
      %p72 = por %p70, %p71
      %p73 = scmp.ne.s32.totalorder %s65, %s68
      %p74 = scmp.eq.s32.totalorder %s13, 0
      %p75 = por %p73, %p74
      %p76 = scmp.ne.s32.totalorder %s65, %s68
      %p77 = scmp.eq.s32.totalorder %s18, 1
      %p78 = por %p76, %p77
      %p79 = scmp.ne.s32.totalorder %s68, %s69
      %p80 = scmp.eq.s32.totalorder %s18, 0
      %p81 = por %p79, %p80
      %p82 = scmp.ne.s32.totalorder %s68, %s69
      %p83 = scmp.eq.s32.totalorder %s19, 1
      %p84 = por %p82, %p83
      %p86 = scmp.ne.s32.totalorder %s69, %s85
      %p87 = scmp.eq.s32.totalorder %s19, 0
      %p88 = por %p86, %p87
      %p89 = scmp.le.s32.totalorder 1, %s13
      %p90 = scmp.lt.s32.totalorder %s13, 3
      %p91 = pnand %p89, %p90
      %p92 = pneg %p91
      // Predicated region
      $region9: #{tpu_custom_call.1} parent=5 // pred_check
        _
      $region10: #{tpu_custom_call.1} parent=5 // pred_check_branch
        %94 = sbr.rel (%p91) target = $region12
      $region11: #{tpu_custom_call.1} parent=5 // pred_region
        %s95 = ssub.s32 %s13, 1
      $region12: #{tpu_custom_call.1} parent=5 // pred_fallthru
        _
      %p96 = scmp.lt.s32.totalorder %s13, 2
      // Predicated region
      $region13: #{tpu_custom_call.1} parent=5 // pred_check
        %p97 = pneg %p96
      $region14: #{tpu_custom_call.1} parent=5 // pred_check_branch
        %99 = sbr.rel (%p97) target = $region16
      $region15: #{tpu_custom_call.1} parent=5 // pred_region
        // Predicated region
        $region17: #{tpu_custom_call.1} parent=15 // pred_check
          %p100 = pneg %p47
        $region18: #{tpu_custom_call.1} parent=15 // pred_check_branch
          %102 = sbr.rel (%p100) target = $region20
        $region19: #{tpu_custom_call.1} parent=15 // pred_region
          %s103 = sand.u32 %s37, 1
          %s104 = scalar_lea.sflag [#allocation3], %s103
          %s105 = sand.u32 %s37, 1
          %s106 = smul.addr %s105, 8
          %s107 = scalar_lea.vmem [#allocation2], %s106
          %s109 = ssub.s32 128, 128
          %110 = vsyncadd %s104, %s109
          %s111 = smul.addr %s20, 4
          %s112 = sadd.s32 %s21, %s111
          %s113 = smul.addr %s112, 32
          %s114 = scalar_lea.hbm %s0, %s113
          %s115 = sshll.u32 %s107, 4
          %s116 = int_to_ptr.vmem [resolvable:$true] %s115
          %121 = dma.hbm_to_vmem [thread:$0]  %s114, 128, %s116, %s104, 32, 32, 2
        $region20: #{tpu_custom_call.1} parent=15 // pred_fallthru
          _
      $region16: #{tpu_custom_call.1} parent=5 // pred_fallthru
        _
      %p122 = scmp.le.s32.totalorder 1, %s13
      %p123 = scmp.lt.s32.totalorder %s13, 3
      %p124 = pnand %p122, %p123
      %p125 = pneg %p124
      // Predicated region
      $region21: #{tpu_custom_call.1} parent=5 // pred_check
        _
      $region22: #{tpu_custom_call.1} parent=5 // pred_check_branch
        %127 = sbr.rel (%p124) target = $region24
      $region23: #{tpu_custom_call.1} parent=5 // pred_region
        %s128 = ssub.s32 %s13, 1
        %s129 = sand.u32 %s40, 1
        %s130 = scalar_lea.sflag [#allocation3], %s129
        %s131 = sand.u32 %s40, 1
        %s132 = smul.addr %s131, 8
        %s133 = scalar_lea.vmem [#allocation2], %s132
        // Predicated region
        $region25: #{tpu_custom_call.1} parent=23 // pred_check
          %p134 = pneg %p53
        $region26: #{tpu_custom_call.1} parent=23 // pred_check_branch
          %136 = sbr.rel (%p134) target = $region28
        $region27: #{tpu_custom_call.1} parent=23 // pred_region
          %137 = dma.done %s130, 128
        $region28: #{tpu_custom_call.1} parent=23 // pred_fallthru
          _
        %s138 = sand.u32 %s40, 1
        %s139 = scalar_lea.sflag [#allocation3], %s138
        %s140 = sand.u32 %s40, 1
        %s141 = smul.addr %s140, 8
        %s142 = scalar_lea.vmem [#allocation2], %s141
        %p143 = pneg %p53
        %p144 = pneg %p50
        %p145 = pneg %p81
        %p146 = pneg %p78
        %s147 = sand.u32 %s68, 1
        %s148 = scalar_lea.sflag [#allocation4], %s147
        %s149 = sand.u32 %s68, 1
        %s150 = smul.addr %s149, 8
        %s151 = scalar_lea.vmem [#allocation5], %s150
        %v152 = vld [vmem:[%s133] sm:$0x3]
        %v153 = vld [vmem:[%s133 + $0x2] sm:$0x3]
        %v154 = vld [vmem:[%s133 + $0x4] sm:$0x3]
        %v155 = vld [vmem:[%s133 + $0x6] sm:$0x3]
        %v156 = vmul.f32 %v152, %v152
        %v157 = vmul.f32 %v153, %v153
        %v158 = vmul.f32 %v154, %v154
        %v159 = vmul.f32 %v155, %v155
        %vm160 = vcmask 1041408
        %v161 = vsel %vm160, %v156, 0.0
        %v162 = vsel %vm160, %v157, 0.0
        %v163 = vadd.f32 %v161, %v162
        %v164 = vsel %vm160, %v158, 0.0
        %v165 = vadd.f32 %v163, %v164
        %v166 = vsel %vm160, %v159, 0.0
        %v167 = vadd.f32 %v165, %v166
        %v168 = vmul.f32 %v167, 0.25
        %v169 = vadd.f32 %v168, 1e-08
        %v170 = vrsqrt.pop %v169
        %v171 = vmul.f32 %v152, %v170
        %v172 = vmul.f32 %v153, %v170
        %v173 = vmul.f32 %v154, %v170
        %v174 = vmul.f32 %v155, %v170
        %175 = vst [vmem:[%s151] sm:$0x3] %v171
        %176 = vst [vmem:[%s151 + $0x2] sm:$0x3] %v172
        %177 = vst [vmem:[%s151 + $0x4] sm:$0x3] %v173
        %178 = vst [vmem:[%s151 + $0x6] sm:$0x3] %v174
        %s179 = sand.u32 %s68, 1
        %s180 = scalar_lea.sflag [#allocation4], %s179
        %s181 = sand.u32 %s68, 1
        %s182 = smul.addr %s181, 8
        %s183 = scalar_lea.vmem [#allocation5], %s182
        // Predicated region
        $region29: #{tpu_custom_call.1} parent=23 // pred_check
          %p184 = pneg %p78
        $region30: #{tpu_custom_call.1} parent=23 // pred_check_branch
          %186 = sbr.rel (%p184) target = $region32
        $region31: #{tpu_custom_call.1} parent=23 // pred_region
          %s188 = ssub.s32 128, 128
          %189 = vsyncadd %s180, %s188
          %s190 = smul.addr %s22, 4
          %s191 = sadd.s32 %s23, %s190
          %s192 = smul.addr %s191, 32
          %s193 = scalar_lea.hbm %s1, %s192
          %s194 = sshll.u32 %s183, 4
          %s195 = int_to_ptr.vmem [resolvable:$true] %s194
          %200 = dma.vmem_to_hbm [thread:$0]  %s195, 128, %s193, %s180, 32, 32, 2
        $region32: #{tpu_custom_call.1} parent=23 // pred_fallthru
          _
      $region24: #{tpu_custom_call.1} parent=5 // pred_fallthru
        _
      %p201 = scmp.le.s32.totalorder 2, %s13
      // Predicated region
      $region33: #{tpu_custom_call.1} parent=5 // pred_check
        %p202 = pneg %p201
      $region34: #{tpu_custom_call.1} parent=5 // pred_check_branch
        %204 = sbr.rel (%p202) target = $region36
      $region35: #{tpu_custom_call.1} parent=5 // pred_region
        %s205 = ssub.s32 %s13, 2
        // Predicated region
        $region37: #{tpu_custom_call.1} parent=35 // pred_check
          %p206 = pneg %p84
        $region38: #{tpu_custom_call.1} parent=35 // pred_check_branch
          %208 = sbr.rel (%p206) target = $region40
        $region39: #{tpu_custom_call.1} parent=35 // pred_region
          %s209 = sand.u32 %s69, 1
          %s210 = scalar_lea.sflag [#allocation4], %s209
          %s211 = sand.u32 %s69, 1
          %s212 = smul.addr %s211, 8
          %s213 = scalar_lea.vmem [#allocation5], %s212
          %214 = dma.done %s210, 128
        $region40: #{tpu_custom_call.1} parent=35 // pred_fallthru
          _
      $region36: #{tpu_custom_call.1} parent=5 // pred_fallthru
        _
    $region6: #{tpu_custom_call.1} parent=1 // loop_footer
      %s17 = sadd.s32 1, %s13
    $region7: #{tpu_custom_call.1} parent=1 // loop_footer_branch
      %12 = sbr.rel target = $region3
    $region8: #{tpu_custom_call.1} parent=1 // loop_exit
      _
    %215 = vsyncpa [#allocation3], 1
    %s216 = scalar_lea.sflag [#allocation3], 1
    %217 = vsyncpa %s216, 1
    %218 = vsyncpa [#allocation4], 1
    %s219 = scalar_lea.sflag [#allocation4], 1
    %220 = vsyncpa %s219, 1

</llo_original>
